<compile_context>
chip_gen: v6e
topology: v6e:2x2x1
jax: 0.10.0
libtpu: 0.0.40
codegen_flags: <defaults>
</compile_context>

<pallas_src>
import functools
import math

import jax
import jax.numpy as jnp
from jax import lax
from jax.experimental import pallas as pl
from jax.experimental.pallas import tpu as pltpu


# ----------------------------- kernel -------------------------------------- #

def frequency_layer_kernel(x_ref, a_ref, at_ref, beta_ref, lnw_ref, lnb_ref,
                           o_ref, *, eps):
    """One grid step: a block of `bb` batch rows, each [S, H]."""
    bb, S, H = x_ref.shape

    a = a_ref[...]                                             # [S, r] matmul dtype
    at = at_ref[...]                                           # [r, S]

    # Hoisted, loop-invariant broadcasts (computed once per block, not per row).
    beta2 = jnp.broadcast_to(
        jnp.square(beta_ref[...].astype(jnp.float32)), (S, H))  # [S, H]
    w = jnp.broadcast_to(lnw_ref[...].astype(jnp.float32), (S, H))
    b = jnp.broadcast_to(lnb_ref[...].astype(jnp.float32), (S, H))

    def body(i, carry):
        x = x_ref[i].astype(jnp.float32)                       # [S, H], f32 math

        # Low-pass = A @ (A^T @ x): rank-r orthogonal projection along seq.
        tmp = jnp.dot(at, x.astype(a.dtype),
                      preferred_element_type=jnp.float32)      # [r, H]
        low = jnp.dot(a, tmp.astype(a.dtype),
                      preferred_element_type=jnp.float32)      # [S, H]

        # semb + residual:  low + beta^2 * (x - low) + x
        y = low + beta2 * (x - low) + x

        # TF-style LayerNorm over hidden; rsqrt goes to the EUP slot.
        u = jnp.mean(y, axis=-1, keepdims=True)
        var = jnp.mean(jnp.square(y - u), axis=-1, keepdims=True)
        o_ref[i] = (w * ((y - u) * lax.rsqrt(var + eps)) + b).astype(o_ref.dtype)
        return carry

    lax.fori_loop(0, bb, body, 0)


# ----------------------------- wrapper -------------------------------------- #

def _vmem_capacity_bytes():
    """Per-core VMEM capacity; conservative fallback if the query fails."""
    try:
        return int(pltpu.get_tpu_info().vmem_capacity_bytes)
    except Exception:
        return 64 << 20          # v7x per-TensorCore figure (most restrictive)


def _pick_batch_block(B, S, H, x_bytes, o_bytes, budget_bytes,
                      max_block_rows=256):
    """Largest divisor of B whose double-buffered x+out blocks fit the budget,
    while keeping >= 2 grid steps so the parallel batch axis can shard across
    v7x's two TensorCores."""
    bb = 1
    for d in range(1, min(B, max_block_rows) + 1):
        if B % d:
            continue
        if B >= 2 and (B // d) < 2:          # keep grid length >= 2 (megacore)
            continue
        if 2 * d * S * H * (x_bytes + o_bytes) <= budget_bytes:
            bb = d
    return bb


def make_lowpass_basis(S, c, dtype=jnp.float32):
    """Real orthonormal basis A [S, r_pad] such that A @ A.T equals
    irfft(truncate(rfft(., norm='ortho')), n=S, norm='ortho') along the sequence
    axis, keeping the first c_kept = c // 2 + 1 rfft bins.  The rank is padded
    to a multiple of 8 with zero columns (does not change A @ A.T)."""
    c_kept = min(c // 2 + 1, S // 2 + 1)
    n = jnp.arange(S, dtype=jnp.float32)
    cols = [jnp.ones((S,), jnp.float32) / math.sqrt(S)]            # k = 0 (DC)
    for k in range(1, c_kept):
        ang = (2.0 * math.pi * k / S) * n
        if S % 2 == 0 and k == S // 2:                             # Nyquist bin
            cols.append(jnp.cos(ang) / math.sqrt(S))
        else:
            cols.append(math.sqrt(2.0 / S) * jnp.cos(ang))
            cols.append(math.sqrt(2.0 / S) * jnp.sin(ang))
    a = jnp.stack(cols, axis=1)                                    # [S, r]
    r = a.shape[1]
    r_pad = ((r + 7) // 8) * 8
    if r_pad > r:
        a = jnp.concatenate([a, jnp.zeros((S, r_pad - r), jnp.float32)], axis=1)
    return a.astype(dtype)


def make_frequency_layer(B, S, H, r, *, x_dtype, out_dtype=None,
                         matmul_dtype=jnp.float32, batch_block=None, eps=1e-12):
    out_dtype = x_dtype if out_dtype is None else out_dtype
    x_bytes = jnp.dtype(x_dtype).itemsize
    o_bytes = jnp.dtype(out_dtype).itemsize
    w_bytes = jnp.dtype(matmul_dtype).itemsize

    cap = _vmem_capacity_bytes()
    # Budget for double-buffered x + out blocks: ~1/4 of per-core VMEM
    # (32 MiB on 128 MiB v5e/v6e, 16 MiB on 64 MiB v7x), capped at 32 MiB.
    budget = min(cap // 4, 32 << 20)
    bb = batch_block if batch_block is not None else _pick_batch_block(
        B, S, H, x_bytes, o_bytes, budget)
    assert B % bb == 0, "batch block must divide batch"

    kernel = functools.partial(frequency_layer_kernel, eps=eps)

    def rep(shape):  # replicated weight block (constant index map)
        zeros = (0,) * len(shape)
        return pl.BlockSpec(shape, lambda i, zeros=zeros: zeros)

    in_specs = [
        pl.BlockSpec((bb, S, H), lambda i: (i, 0, 0)),   # x
        rep((S, r)),                                     # A
        rep((r, S)),                                     # A^T
        rep((1, H)),                                     # sqrt_beta
        rep((1, H)), rep((1, H)),                        # LayerNorm weight, bias
    ]

    weight_bytes = 2 * S * r * w_bytes + 3 * H * 4
    need = (2 * bb * S * H * (x_bytes + o_bytes)         # double-buffered x + out
            + 2 * weight_bytes                           # double-buffered weights
            + (4 << 20))                                 # slack / internal scratch
    vmem_limit = min(int(0.9 * cap), max(32 << 20, int(need)))

    cost = pl.CostEstimate(
        flops=int(B * (4 * S * r * H + 10 * S * H)),
        transcendentals=int(B * S),                      # one rsqrt per row
        bytes_accessed=int(B * S * H * (x_bytes + o_bytes) + weight_bytes),
    )

    return pl.pallas_call(
        kernel,
        out_shape=jax.ShapeDtypeStruct((B, S, H), out_dtype),
        grid_spec=pltpu.PrefetchScalarGridSpec(
            num_scalar_prefetch=0,
            grid=(B // bb,),
            in_specs=in_specs,
            out_specs=pl.BlockSpec((bb, S, H), lambda i: (i, 0, 0)),
        ),
        compiler_params=pltpu.CompilerParams(
            dimension_semantics=("parallel",),
            vmem_limit_bytes=int(vmem_limit)),
        cost_estimate=cost,
    )


def init_params(key, S, H, c, *, matmul_dtype=jnp.float32):
    a = make_lowpass_basis(S, c)                         # [S, r_pad] f32
    return {
        "a": a.astype(matmul_dtype),
        "at": a.T.astype(matmul_dtype),
        "sqrt_beta": jax.random.normal(key, (1, H), jnp.float32),  # torch.randn init
        "ln_w": jnp.ones((1, H), jnp.float32),
        "ln_b": jnp.zeros((1, H), jnp.float32),
    }


def frequency_layer(x, params, *, batch_block=None, eps=1e-12):
    B, S, H = x.shape
    r = params["a"].shape[1]
    fn = make_frequency_layer(B, S, H, r, x_dtype=x.dtype,
                              matmul_dtype=params["a"].dtype,
                              batch_block=batch_block, eps=eps)
    return fn(x, params["a"], params["at"], params["sqrt_beta"],
              params["ln_w"], params["ln_b"])


# ----------------------------- reference ------------------------------------ #

def frequency_layer_reference(x, sqrt_beta, ln_w, ln_b, c, eps=1e-12):
    """Pure-JAX port of the PyTorch FrequencyLayer.forward (eval mode)."""
    B, S, H = x.shape
    xf = jnp.fft.rfft(x, axis=1, norm="ortho")
    keep = (jnp.arange(S // 2 + 1) < (c // 2 + 1))[None, :, None]
    low = jnp.fft.irfft(jnp.where(keep, xf, 0.0), n=S, axis=1, norm="ortho")
    semb = low + sqrt_beta ** 2 * (x - low)
    y = semb + x
    u = y.mean(-1, keepdims=True)
    s = ((y - u) ** 2).mean(-1, keepdims=True)
    return ln_w * ((y - u) / jnp.sqrt(s + eps)) + ln_b


# ----------------------------- demo / check --------------------------------- #

if __name__ == "__main__":
    config = dict(hidden_size=32, c=5, hidden_dropout_prob=0.0)
    B, S = 2, 8
    H = config["hidden_size"]

    key = jax.random.PRNGKey(0)
    k_x, k_p = jax.random.split(key)
    x = jax.random.normal(k_x, (B, S, H), dtype=jnp.float32)

    params = init_params(k_p, S, H, config["c"])         # f32 basis by default

    # 1) f32 I/O path vs. the rfft/irfft reference (tight tolerance).
    out = jax.block_until_ready(frequency_layer(x, params))
    ref = frequency_layer_reference(x, params["sqrt_beta"], params["ln_w"],
                                    params["ln_b"], config["c"])
    assert out.shape == (B, S, H) and out.dtype == x.dtype
    assert bool(jnp.all(jnp.isfinite(out)))
    err = float(jnp.max(jnp.abs(out - ref)))
    assert err < 1e-3, f"f32 path mismatch vs FFT reference: {err}"

    # 2) bf16-in / bf16-out path (internal math in f32): halves HBM bytes on the
    #    memory-bound path; only the output-store rounding differs from ref.
    x_bf = x.astype(jnp.bfloat16)
    out_bf = jax.block_until_ready(frequency_layer(x_bf, params))
    assert out_bf.dtype == jnp.bfloat16
    out_bf32 = out_bf.astype(jnp.float32)
    assert bool(jnp.all(jnp.isfinite(out_bf32)))
    ref_bf = frequency_layer_reference(x_bf.astype(jnp.float32),
                                       params["sqrt_beta"], params["ln_w"],
                                       params["ln_b"], config["c"])
    err_bf = float(jnp.max(jnp.abs(out_bf32 - ref_bf)))
    assert err_bf < 5e-2, f"bf16 I/O path deviates too much from reference: {err_bf}"

    print("KERNEL_OK")
</pallas_src>

<mosaic_0001>
module attributes {stable_mosaic.version = 11 : i64} {
  func.func @frequency_layer_kernel(%arg0: i32, %arg1: memref<1x8x32xf32, #tpu.memory_space<vmem>>, %arg2: memref<8x8xf32, #tpu.memory_space<vmem>>, %arg3: memref<8x8xf32, #tpu.memory_space<vmem>>, %arg4: memref<1x32xf32, #tpu.memory_space<vmem>>, %arg5: memref<1x32xf32, #tpu.memory_space<vmem>>, %arg6: memref<1x32xf32, #tpu.memory_space<vmem>>, %arg7: memref<1x8x32xf32, #tpu.memory_space<vmem>>) attributes {dimension_semantics = [#tpu.dimension_semantics<parallel>], iteration_bounds = array<i64: 2>, scalar_prefetch = 0 : i64, scratch_operands = 0 : i64, tpu.core_type = #tpu.core_type<tc>, window_params = [{transform_indices = @transform_0, window_bounds = array<i64: 1, 8, 32>}, {pipeline_mode = #tpu.pipeline_mode<synchronous>, transform_indices = @transform_1, window_bounds = array<i64: 8, 8>}, {pipeline_mode = #tpu.pipeline_mode<synchronous>, transform_indices = @transform_2, window_bounds = array<i64: 8, 8>}, {pipeline_mode = #tpu.pipeline_mode<synchronous>, transform_indices = @transform_3, window_bounds = array<i64: 1, 32>}, {pipeline_mode = #tpu.pipeline_mode<synchronous>, transform_indices = @transform_4, window_bounds = array<i64: 1, 32>}, {pipeline_mode = #tpu.pipeline_mode<synchronous>, transform_indices = @transform_5, window_bounds = array<i64: 1, 32>}, {transform_indices = @transform_6, window_bounds = array<i64: 1, 8, 32>}]} {
    %c0 = arith.constant 0 : index
    %c0_0 = arith.constant 0 : index
    %0 = vector.load %arg2[%c0, %c0_0] : memref<8x8xf32, #tpu.memory_space<vmem>>, vector<8x8xf32>
    %c0_1 = arith.constant 0 : index
    %c0_2 = arith.constant 0 : index
    %1 = vector.load %arg3[%c0_1, %c0_2] : memref<8x8xf32, #tpu.memory_space<vmem>>, vector<8x8xf32>
    %c0_3 = arith.constant 0 : index
    %c0_4 = arith.constant 0 : index
    %2 = vector.load %arg4[%c0_3, %c0_4] : memref<1x32xf32, #tpu.memory_space<vmem>>, vector<1x32xf32>
    %3 = arith.mulf %2, %2 : vector<1x32xf32>
    %4 = vector.shape_cast %3 : vector<1x32xf32> to vector<1x32xf32>
    %5 = vector.broadcast %4 : vector<1x32xf32> to vector<8x32xf32>
    %c0_5 = arith.constant 0 : index
    %c0_6 = arith.constant 0 : index
    %6 = vector.load %arg5[%c0_5, %c0_6] : memref<1x32xf32, #tpu.memory_space<vmem>>, vector<1x32xf32>
    %7 = vector.shape_cast %6 : vector<1x32xf32> to vector<1x32xf32>
    %8 = vector.broadcast %7 : vector<1x32xf32> to vector<8x32xf32>
    %c0_7 = arith.constant 0 : index
    %c0_8 = arith.constant 0 : index
    %9 = vector.load %arg6[%c0_7, %c0_8] : memref<1x32xf32, #tpu.memory_space<vmem>>, vector<1x32xf32>
    %10 = vector.shape_cast %9 : vector<1x32xf32> to vector<1x32xf32>
    %11 = vector.broadcast %10 : vector<1x32xf32> to vector<8x32xf32>
    %c0_i32 = arith.constant 0 : i32
    %12 = arith.index_cast %c0_i32 : i32 to index
    %c0_9 = arith.constant 0 : index
    %c0_10 = arith.constant 0 : index
    %13 = vector.load %arg1[%12, %c0_9, %c0_10] : memref<1x8x32xf32, #tpu.memory_space<vmem>>, vector<1x8x32xf32>
    %14 = vector.shape_cast %13 : vector<1x8x32xf32> to vector<8x32xf32>
    %cst = arith.constant dense<0.000000e+00> : vector<8x32xf32>
    %15 = tpu.matmul %1, %14, %cst {dimension_numbers = #tpu.dot_dimension_numbers<[1], [0], [0], [1], [0, 0, 1, 1], [], []>} : vector<8x8xf32>, vector<8x32xf32>, vector<8x32xf32> -> vector<8x32xf32>
    %cst_11 = arith.constant dense<0.000000e+00> : vector<8x32xf32>
    %16 = tpu.matmul %0, %15, %cst_11 {dimension_numbers = #tpu.dot_dimension_numbers<[1], [0], [0], [1], [0, 0, 1, 1], [], []>} : vector<8x8xf32>, vector<8x32xf32>, vector<8x32xf32> -> vector<8x32xf32>
    %17 = arith.subf %14, %16 : vector<8x32xf32>
    %18 = arith.mulf %5, %17 : vector<8x32xf32>
    %19 = arith.addf %16, %18 : vector<8x32xf32>
    %20 = arith.addf %19, %14 : vector<8x32xf32>
    %cst_12 = arith.constant dense<0.000000e+00> : vector<8xf32>
    %21 = vector.multi_reduction <add>, %20, %cst_12 [1] : vector<8x32xf32> to vector<8xf32>
    %22 = vector.shape_cast %21 : vector<8xf32> to vector<8x1xf32>
    %cst_13 = arith.constant 3.200000e+01 : f32
    %23 = vector.broadcast %cst_13 : f32 to vector<8x1xf32>
    %24 = arith.divf %22, %23 : vector<8x1xf32>
    %25 = vector.broadcast %24 : vector<8x1xf32> to vector<8x32xf32>
    %26 = arith.subf %20, %25 : vector<8x32xf32>
    %27 = arith.mulf %26, %26 : vector<8x32xf32>
    %cst_14 = arith.constant dense<0.000000e+00> : vector<8xf32>
    %28 = vector.multi_reduction <add>, %27, %cst_14 [1] : vector<8x32xf32> to vector<8xf32>
    %29 = vector.shape_cast %28 : vector<8xf32> to vector<8x1xf32>
    %cst_15 = arith.constant 3.200000e+01 : f32
    %30 = vector.broadcast %cst_15 : f32 to vector<8x1xf32>
    %31 = arith.divf %29, %30 : vector<8x1xf32>
    %32 = vector.broadcast %24 : vector<8x1xf32> to vector<8x32xf32>
    %33 = arith.subf %20, %32 : vector<8x32xf32>
    %cst_16 = arith.constant 9.99999996E-13 : f32
    %34 = vector.broadcast %cst_16 : f32 to vector<8x1xf32>
    %35 = arith.addf %31, %34 : vector<8x1xf32>
    %36 = math.rsqrt %35 : vector<8x1xf32>
    %37 = vector.broadcast %36 : vector<8x1xf32> to vector<8x32xf32>
    %38 = arith.mulf %33, %37 : vector<8x32xf32>
    %39 = arith.mulf %8, %38 : vector<8x32xf32>
    %40 = arith.addf %39, %11 : vector<8x32xf32>
    %41 = arith.index_cast %c0_i32 : i32 to index
    %c0_17 = arith.constant 0 : index
    %c0_18 = arith.constant 0 : index
    %42 = vector.load %arg7[%41, %c0_17, %c0_18] : memref<1x8x32xf32, #tpu.memory_space<vmem>>, vector<1x8x32xf32>
    %43 = vector.shape_cast %42 : vector<1x8x32xf32> to vector<8x32xf32>
    %44 = vector.shape_cast %40 : vector<8x32xf32> to vector<1x8x32xf32>
    tpu.vector_store %arg7[%41, %c0_17, %c0_18], %44 {strides = array<i32>} : memref<1x8x32xf32, #tpu.memory_space<vmem>>, vector<1x8x32xf32>,
    %c1_i32 = arith.constant 1 : i32
    return
  }
  func.func @transform_0(%arg0: i32) -> (i32, i32, i32) {
    %c0_i32 = arith.constant 0 : i32
    %c0_i32_0 = arith.constant 0 : i32
    %c0_i32_1 = arith.constant 0 : i32
    return %arg0, %c0_i32, %c0_i32_0 : i32, i32, i32
  }
  func.func @transform_1(%arg0: i32) -> (i32, i32) {
    %c0_i32 = arith.constant 0 : i32
    %c0_i32_0 = arith.constant 0 : i32
    %c0_i32_1 = arith.constant 0 : i32
    return %c0_i32, %c0_i32_0 : i32, i32
  }
  func.func @transform_2(%arg0: i32) -> (i32, i32) {
    %c0_i32 = arith.constant 0 : i32
    %c0_i32_0 = arith.constant 0 : i32
    %c0_i32_1 = arith.constant 0 : i32
    return %c0_i32, %c0_i32_0 : i32, i32
  }
  func.func @transform_3(%arg0: i32) -> (i32, i32) {
    %c0_i32 = arith.constant 0 : i32
    %c0_i32_0 = arith.constant 0 : i32
    %c0_i32_1 = arith.constant 0 : i32
    return %c0_i32, %c0_i32_0 : i32, i32
  }
  func.func @transform_4(%arg0: i32) -> (i32, i32) {
    %c0_i32 = arith.constant 0 : i32
    %c0_i32_0 = arith.constant 0 : i32
    %c0_i32_1 = arith.constant 0 : i32
    return %c0_i32, %c0_i32_0 : i32, i32
  }
  func.func @transform_5(%arg0: i32) -> (i32, i32) {
    %c0_i32 = arith.constant 0 : i32
    %c0_i32_0 = arith.constant 0 : i32
    %c0_i32_1 = arith.constant 0 : i32
    return %c0_i32, %c0_i32_0 : i32, i32
  }
  func.func @transform_6(%arg0: i32) -> (i32, i32, i32) {
    %c0_i32 = arith.constant 0 : i32
    %c0_i32_0 = arith.constant 0 : i32
    %c0_i32_1 = arith.constant 0 : i32
    return %arg0, %c0_i32, %c0_i32_0 : i32, i32, i32
  }
}

</mosaic_0001>

<llo_original>
// kernel: tpu_custom_call.1
$region0: #{tpu_custom_call.1}
  #allocation0 [shape = 'u32[]', space=smem, size = 0x4, offset = 0x4, fixed_abs, tag = 'smem constant byte address 0x4 - core index']
  #allocation1 [shape = 'u32[144,128]{1,0:T(1,128)}', space=vmem, size = 0x12000, scoped, tag = 'internal scratch']
  %s0 = inlined_call_operand.hbm [shape: f32[2,8,32], index: 0, kind: input, shape index: {}]
  %s1 = inlined_call_operand.hbm [shape: f32[8,8], index: 1, kind: input, shape index: {}]
  %s2 = inlined_call_operand.hbm [shape: f32[8,8], index: 2, kind: input, shape index: {}]
  %s3 = inlined_call_operand.vmem [shape: f32[1,32], index: 3, kind: input, shape index: {}]
  %s4 = inlined_call_operand.vmem [shape: f32[1,32], index: 4, kind: input, shape index: {}]
  %s5 = inlined_call_operand.vmem [shape: f32[1,32], index: 5, kind: input, shape index: {}]
  %s6 = inlined_call_operand.hbm [shape: f32[2,8,32], index: 6, kind: output, shape index: {}]
  %s7 = sld [smem:[#allocation0]]
  $region69: #{tpu_custom_call.1} parent=0
    _
  %s9 = ssub.s32 1, %s7
  %s10 = scalar_select 0, %s9, %s7
  $region1: #{tpu_custom_call.1} parent=0
    #allocation2 [shape = 'u8[8192]{0}', space=vmem, size = 0x2000, scoped, tag = 'input window, operand 0']
    #allocation3 [shape = 's32[2]{0}', space=sflag, size = 0x8, scoped, tag = 'scoped memory for tpu_custom_call.1']
    #allocation4 [shape = 's32[2]{0}', space=sflag, size = 0x8, scoped, tag = 'scoped memory for tpu_custom_call.1']
    #allocation5 [shape = 'u8[4096]{0}', space=vmem, size = 0x1000, scoped, tag = 'input window, operand 1, single buffered']
    #allocation6 [shape = 's32[1]{0}', space=sflag, size = 0x4, scoped, tag = 'scoped memory for tpu_custom_call.1']
    #allocation7 [shape = 'u8[4096]{0}', space=vmem, size = 0x1000, scoped, tag = 'input window, operand 2, single buffered']
    #allocation8 [shape = 'u8[8192]{0}', space=vmem, size = 0x2000, scoped, tag = 'output window, operand 0']
    %11 = vsyncpa [#allocation3], 0
    %s12 = scalar_lea.sflag [#allocation3], 1
    %13 = vsyncpa %s12, 0
    %14 = vsyncpa [#allocation6], 0
    %15 = vsyncpa [#allocation4], 0
    %s16 = scalar_lea.sflag [#allocation4], 1
    %17 = vsyncpa %s16, 0
    loop: start=0, step=1, limit=4
    $region2: #{tpu_custom_call.1} parent=1 // loop_pre_header
      _
    $region3: #{tpu_custom_call.1} parent=1 // loop_header
      %s19 = sphi 0, %s23
      %p20 = scmp.ge.s32.totalorder %s19, 4
      %s29 = sphi 0, %s31
      %s32 = sphi 0, %s29
      %s33 = sphi 0, %s32
      %s49 = sphi 0, %s33
      %s53 = sphi 0, %s53
      %s55 = sphi 0, %s53
      %s56 = sphi 0, %s55
      %s70 = sphi 0, %s56
      %s74 = sphi 0, %s74
      %s76 = sphi 0, %s74
      %s77 = sphi 0, %s76
      %s91 = sphi 0, %s77
      %s95 = sphi 0, %s95
      %s97 = sphi 0, %s95
      %s98 = sphi 0, %s97
      %s112 = sphi 0, %s98
      %s116 = sphi 0, %s116
      %s118 = sphi 0, %s116
      %s119 = sphi 0, %s118
      %s133 = sphi 0, %s119
      %s137 = sphi 0, %s137
      %s139 = sphi 0, %s137
      %s140 = sphi 0, %s139
      %s154 = sphi 0, %s140
      %s160 = sphi 0, %s162
      %s163 = sphi 0, %s160
      %s164 = sphi 0, %s163
      %s180 = sphi 0, %s164
    $region4: #{tpu_custom_call.1} parent=1 // loop_header_branch
      %22 = sbr.rel (%p20) target = $region8
    $region5: #{tpu_custom_call.1} parent=1 // loop_body
      %s24 = ssub.s32 %s19, 1
      %s25 = ssub.s32 %s19, 2
      %s26 = sadd.s32 %s19, 1
      %s27 = ssub.s32 %s19, %s26
      %p28 = scmp.eq.s32.totalorder %s27, 0
      %s30 = sadd.s32 %s29, 1
      %s31 = scalar_select %p28, %s29, %s30
      %p34 = pneg %p28
      %p35 = scmp.eq.s32.totalorder %s19, 1
      %p36 = por %p34, %p35
      %p37 = scmp.ne.s32.totalorder %s29, %s32
      %p38 = scmp.eq.s32.totalorder %s19, 0
      %p39 = por %p37, %p38
      %p40 = scmp.ne.s32.totalorder %s29, %s32
      %p41 = scmp.eq.s32.totalorder %s24, 1
      %p42 = por %p40, %p41
      %p43 = scmp.ne.s32.totalorder %s32, %s33
      %p44 = scmp.eq.s32.totalorder %s24, 0
      %p45 = por %p43, %p44
      %p46 = scmp.ne.s32.totalorder %s32, %s33
      %p47 = scmp.eq.s32.totalorder %s25, 1
      %p48 = por %p46, %p47
      %p50 = scmp.ne.s32.totalorder %s33, %s49
      %p51 = scmp.eq.s32.totalorder %s25, 0
      %p52 = por %p50, %p51
      %s54 = sadd.s32 %s53, 1
      %p57 = scmp.eq.s32.totalorder %s19, 1
      %p58 = scmp.ne.s32.totalorder %s53, %s55
      %p59 = scmp.eq.s32.totalorder %s19, 0
      %p60 = por %p58, %p59
      %p61 = scmp.ne.s32.totalorder %s53, %s55
      %p62 = scmp.eq.s32.totalorder %s24, 1
      %p63 = por %p61, %p62
      %p64 = scmp.ne.s32.totalorder %s55, %s56
      %p65 = scmp.eq.s32.totalorder %s24, 0
      %p66 = por %p64, %p65
      %p67 = scmp.ne.s32.totalorder %s55, %s56
      %p68 = scmp.eq.s32.totalorder %s25, 1
      %p69 = por %p67, %p68
      %p71 = scmp.ne.s32.totalorder %s56, %s70
      %p72 = scmp.eq.s32.totalorder %s25, 0
      %p73 = por %p71, %p72
      %s75 = sadd.s32 %s74, 1
      %p78 = scmp.eq.s32.totalorder %s19, 1
      %p79 = scmp.ne.s32.totalorder %s74, %s76
      %p80 = scmp.eq.s32.totalorder %s19, 0
      %p81 = por %p79, %p80
      %p82 = scmp.ne.s32.totalorder %s74, %s76
      %p83 = scmp.eq.s32.totalorder %s24, 1
      %p84 = por %p82, %p83
      %p85 = scmp.ne.s32.totalorder %s76, %s77
      %p86 = scmp.eq.s32.totalorder %s24, 0
      %p87 = por %p85, %p86
      %p88 = scmp.ne.s32.totalorder %s76, %s77
      %p89 = scmp.eq.s32.totalorder %s25, 1
      %p90 = por %p88, %p89
      %p92 = scmp.ne.s32.totalorder %s77, %s91
      %p93 = scmp.eq.s32.totalorder %s25, 0
      %p94 = por %p92, %p93
      %s96 = sadd.s32 %s95, 1
      %p99 = scmp.eq.s32.totalorder %s19, 1
      %p100 = scmp.ne.s32.totalorder %s95, %s97
      %p101 = scmp.eq.s32.totalorder %s19, 0
      %p102 = por %p100, %p101
      %p103 = scmp.ne.s32.totalorder %s95, %s97
      %p104 = scmp.eq.s32.totalorder %s24, 1
      %p105 = por %p103, %p104
      %p106 = scmp.ne.s32.totalorder %s97, %s98
      %p107 = scmp.eq.s32.totalorder %s24, 0
      %p108 = por %p106, %p107
      %p109 = scmp.ne.s32.totalorder %s97, %s98
      %p110 = scmp.eq.s32.totalorder %s25, 1
      %p111 = por %p109, %p110
      %p113 = scmp.ne.s32.totalorder %s98, %s112
      %p114 = scmp.eq.s32.totalorder %s25, 0
      %p115 = por %p113, %p114
      %s117 = sadd.s32 %s116, 1
      %p120 = scmp.eq.s32.totalorder %s19, 1
      %p121 = scmp.ne.s32.totalorder %s116, %s118
      %p122 = scmp.eq.s32.totalorder %s19, 0
      %p123 = por %p121, %p122
      %p124 = scmp.ne.s32.totalorder %s116, %s118
      %p125 = scmp.eq.s32.totalorder %s24, 1
      %p126 = por %p124, %p125
      %p127 = scmp.ne.s32.totalorder %s118, %s119
      %p128 = scmp.eq.s32.totalorder %s24, 0
      %p129 = por %p127, %p128
      %p130 = scmp.ne.s32.totalorder %s118, %s119
      %p131 = scmp.eq.s32.totalorder %s25, 1
      %p132 = por %p130, %p131
      %p134 = scmp.ne.s32.totalorder %s119, %s133
      %p135 = scmp.eq.s32.totalorder %s25, 0
      %p136 = por %p134, %p135
      %s138 = sadd.s32 %s137, 1
      %p141 = scmp.eq.s32.totalorder %s19, 1
      %p142 = scmp.ne.s32.totalorder %s137, %s139
      %p143 = scmp.eq.s32.totalorder %s19, 0
      %p144 = por %p142, %p143
      %p145 = scmp.ne.s32.totalorder %s137, %s139
      %p146 = scmp.eq.s32.totalorder %s24, 1
      %p147 = por %p145, %p146
      %p148 = scmp.ne.s32.totalorder %s139, %s140
      %p149 = scmp.eq.s32.totalorder %s24, 0
      %p150 = por %p148, %p149
      %p151 = scmp.ne.s32.totalorder %s139, %s140
      %p152 = scmp.eq.s32.totalorder %s25, 1
      %p153 = por %p151, %p152
      %p155 = scmp.ne.s32.totalorder %s140, %s154
      %p156 = scmp.eq.s32.totalorder %s25, 0
      %p157 = por %p155, %p156
      %s158 = ssub.s32 %s19, %s26
      %p159 = scmp.eq.s32.totalorder %s158, 0
      %s161 = sadd.s32 %s160, 1
      %s162 = scalar_select %p159, %s160, %s161
      %p165 = pneg %p159
      %p166 = scmp.eq.s32.totalorder %s19, 1
      %p167 = por %p165, %p166
      %p168 = scmp.ne.s32.totalorder %s160, %s163
      %p169 = scmp.eq.s32.totalorder %s19, 0
      %p170 = por %p168, %p169
      %p171 = scmp.ne.s32.totalorder %s160, %s163
      %p172 = scmp.eq.s32.totalorder %s24, 1
      %p173 = por %p171, %p172
      %p174 = scmp.ne.s32.totalorder %s163, %s164
      %p175 = scmp.eq.s32.totalorder %s24, 0
      %p176 = por %p174, %p175
      %p177 = scmp.ne.s32.totalorder %s163, %s164
      %p178 = scmp.eq.s32.totalorder %s25, 1
      %p179 = por %p177, %p178
      %p181 = scmp.ne.s32.totalorder %s164, %s180
      %p182 = scmp.eq.s32.totalorder %s25, 0
      %p183 = por %p181, %p182
      %p184 = scmp.le.s32.totalorder 1, %s19
      %p185 = scmp.lt.s32.totalorder %s19, 3
      %p186 = pnand %p184, %p185
      %p187 = pneg %p186
      // Predicated region
      $region9: #{tpu_custom_call.1} parent=5 // pred_check
        _
      $region10: #{tpu_custom_call.1} parent=5 // pred_check_branch
        %189 = sbr.rel (%p186) target = $region12
      $region11: #{tpu_custom_call.1} parent=5 // pred_region
        %s190 = ssub.s32 %s19, 1
        // Predicated region
        $region13: #{tpu_custom_call.1} parent=11 // pred_check
          %p191 = pneg %p66
        $region14: #{tpu_custom_call.1} parent=11 // pred_check_branch
          %193 = sbr.rel (%p191) target = $region16
        $region15: #{tpu_custom_call.1} parent=11 // pred_region
          %s195 = ssub.s32 128, 128
          %196 = vsyncadd [#allocation6], %s195
          %s198 = sshll.u32 [#allocation5], 4
          %s199 = int_to_ptr.vmem [resolvable:$true] %s198
          %201 = dma.hbm_to_vmem [thread:$0]  %s1, 128, %s199, [#allocation6]
        $region16: #{tpu_custom_call.1} parent=11 // pred_fallthru
          _
        // Predicated region
        $region17: #{tpu_custom_call.1} parent=11 // pred_check
          %p202 = pneg %p87
        $region18: #{tpu_custom_call.1} parent=11 // pred_check_branch
          %204 = sbr.rel (%p202) target = $region20
        $region19: #{tpu_custom_call.1} parent=11 // pred_region
          %s206 = ssub.s32 128, 128
          %207 = vsyncadd [#allocation6], %s206
          %s209 = sshll.u32 [#allocation7], 4
          %s210 = int_to_ptr.vmem [resolvable:$true] %s209
          %212 = dma.hbm_to_vmem [thread:$0]  %s2, 128, %s210, [#allocation6]
        $region20: #{tpu_custom_call.1} parent=11 // pred_fallthru
          _
        // Predicated region
        $region21: #{tpu_custom_call.1} parent=11 // pred_check
          %p213 = pneg %p108
        $region22: #{tpu_custom_call.1} parent=11 // pred_check_branch
          %215 = sbr.rel (%p213) target = $region24
        $region23: #{tpu_custom_call.1} parent=11 // pred_region
          _
        $region24: #{tpu_custom_call.1} parent=11 // pred_fallthru
          _
        // Predicated region
        $region25: #{tpu_custom_call.1} parent=11 // pred_check
          %p216 = pneg %p129
        $region26: #{tpu_custom_call.1} parent=11 // pred_check_branch
          %218 = sbr.rel (%p216) target = $region28
        $region27: #{tpu_custom_call.1} parent=11 // pred_region
          _
        $region28: #{tpu_custom_call.1} parent=11 // pred_fallthru
          _
        // Predicated region
        $region29: #{tpu_custom_call.1} parent=11 // pred_check
          %p219 = pneg %p150
        $region30: #{tpu_custom_call.1} parent=11 // pred_check_branch
          %221 = sbr.rel (%p219) target = $region32
        $region31: #{tpu_custom_call.1} parent=11 // pred_region
          _
        $region32: #{tpu_custom_call.1} parent=11 // pred_fallthru
          _
      $region12: #{tpu_custom_call.1} parent=5 // pred_fallthru
        _
      %p222 = scmp.lt.s32.totalorder %s19, 2
      // Predicated region
      $region33: #{tpu_custom_call.1} parent=5 // pred_check
        %p223 = pneg %p222
      $region34: #{tpu_custom_call.1} parent=5 // pred_check_branch
        %225 = sbr.rel (%p223) target = $region36
      $region35: #{tpu_custom_call.1} parent=5 // pred_region
        // Predicated region
        $region37: #{tpu_custom_call.1} parent=35 // pred_check
          %p226 = pneg %p39
        $region38: #{tpu_custom_call.1} parent=35 // pred_check_branch
          %228 = sbr.rel (%p226) target = $region40
        $region39: #{tpu_custom_call.1} parent=35 // pred_region
          %s229 = sand.u32 %s29, 1
          %s230 = scalar_lea.sflag [#allocation3], %s229
          %s231 = sand.u32 %s29, 1
          %s232 = smul.addr %s231, 8
          %s233 = scalar_lea.vmem [#allocation2], %s232
          %s235 = ssub.s32 128, 128
          %236 = vsyncadd %s230, %s235
          %s237 = smul.addr %s19, 128
          %s238 = scalar_lea.hbm %s0, %s237
          %s240 = sshll.u32 %s233, 4
          %s241 = int_to_ptr.vmem [resolvable:$true] %s240
          %243 = dma.hbm_to_vmem [thread:$0]  %s238, 128, %s241, %s230
        $region40: #{tpu_custom_call.1} parent=35 // pred_fallthru
          _
      $region36: #{tpu_custom_call.1} parent=5 // pred_fallthru
        _
      %p244 = scmp.le.s32.totalorder 1, %s19
      %p245 = scmp.lt.s32.totalorder %s19, 3
      %p246 = pnand %p244, %p245
      %p247 = pneg %p246
      // Predicated region
      $region41: #{tpu_custom_call.1} parent=5 // pred_check
        _
      $region42: #{tpu_custom_call.1} parent=5 // pred_check_branch
        %249 = sbr.rel (%p246) target = $region44
      $region43: #{tpu_custom_call.1} parent=5 // pred_region
        %s250 = ssub.s32 %s19, 1
        %s251 = sand.u32 %s32, 1
        %s252 = scalar_lea.sflag [#allocation3], %s251
        %s253 = sand.u32 %s32, 1
        %s254 = smul.addr %s253, 8
        %s255 = scalar_lea.vmem [#allocation2], %s254
        // Predicated region
        $region45: #{tpu_custom_call.1} parent=43 // pred_check
          %p256 = pneg %p45
        $region46: #{tpu_custom_call.1} parent=43 // pred_check_branch
          %258 = sbr.rel (%p256) target = $region48
        $region47: #{tpu_custom_call.1} parent=43 // pred_region
          %259 = dma.done %s252, 128
        $region48: #{tpu_custom_call.1} parent=43 // pred_fallthru
          _
        // Predicated region
        $region49: #{tpu_custom_call.1} parent=43 // pred_check
          %p260 = pneg %p66
        $region50: #{tpu_custom_call.1} parent=43 // pred_check_branch
          %262 = sbr.rel (%p260) target = $region52
        $region51: #{tpu_custom_call.1} parent=43 // pred_region
          %263 = dma.done [#allocation6], 128
        $region52: #{tpu_custom_call.1} parent=43 // pred_fallthru
          _
        // Predicated region
        $region53: #{tpu_custom_call.1} parent=43 // pred_check
          %p264 = pneg %p87
        $region54: #{tpu_custom_call.1} parent=43 // pred_check_branch
          %266 = sbr.rel (%p264) target = $region56
        $region55: #{tpu_custom_call.1} parent=43 // pred_region
          %267 = dma.done [#allocation6], 128
        $region56: #{tpu_custom_call.1} parent=43 // pred_fallthru
          _
        %s268 = sand.u32 %s32, 1
        %s269 = scalar_lea.sflag [#allocation3], %s268
        %s270 = sand.u32 %s32, 1
        %s271 = smul.addr %s270, 8
        %s272 = scalar_lea.vmem [#allocation2], %s271
        %p273 = pneg %p45
        %p274 = pneg %p42
        %p275 = pneg %p66
        %p276 = pneg %p63
        %p277 = pneg %p87
        %p278 = pneg %p84
        %p279 = pneg %p108
        %p280 = pneg %p105
        %p281 = pneg %p129
        %p282 = pneg %p126
        %p283 = pneg %p150
        %p284 = pneg %p147
        %p285 = pneg %p176
        %p286 = pneg %p173
        %s287 = sand.u32 %s163, 1
        %s288 = scalar_lea.sflag [#allocation4], %s287
        %s289 = sand.u32 %s163, 1
        %s290 = smul.addr %s289, 8
        %s291 = scalar_lea.vmem [#allocation8], %s290
        %v292 = vld [vmem:[#allocation5] sm:$0xff]
        %v293 = vld [vmem:[#allocation7] sm:$0xff]
        %v294 = vld [vmem:[%s3] sm:$0x1]
        %v295 = vmul.f32 %v294, %v294
        %v297 = vlaneseq
        %v298 = vshrl.u32 %v297, 7
        %v299 = vsub.s32 0, %v298
        %v300 = vrot.slane %v295, %v299
        %v302 = vld [vmem:[%s4] sm:$0x1]
        %v304 = vlaneseq
        %v305 = vshrl.u32 %v304, 7
        %v306 = vsub.s32 0, %v305
        %v307 = vrot.slane %v302, %v306
        %v309 = vld [vmem:[%s5] sm:$0x1]
        %v311 = vlaneseq
        %v312 = vshrl.u32 %v311, 7
        %v313 = vsub.s32 0, %v312
        %v314 = vrot.slane %v309, %v313
        %v316 = vld [vmem:[%s255] sm:$0xff]
        %vm317 = vcmask 64512
        %v319 = vsel %vm317, %v293, 0
        %321 = vmatprep.subr.mxu0 0.0
        %322 = vmatpush1.msra.mxu0 0.0
        %323 = vmatprep.subr.mxu0 0.0
        %324 = vmatpush1.msra.mxu0 0.0
        %325 = vmatprep.subr.mxu0 0.0
        %326 = vmatpush1.msra.mxu0 0.0
        %327 = vmatprep.subr.mxu0 0.0
        %328 = vmatpush1.msra.mxu0 0.0
        %329 = vmatprep.subr.mxu0 0.0
        %330 = vmatpush1.msra.mxu0 0.0
        %331 = vmatprep.subr.mxu0 0.0
        %332 = vmatpush1.msra.mxu0 0.0
        %333 = vmatprep.subr.mxu0 0.0
        %334 = vmatpush1.msra.mxu0 0.0
        %335 = vmatprep.subr.mxu0 0.0
        %336 = vmatpush1.msra.mxu0 0.0
        %337 = vmatprep.subr.mxu0 0.0
        %338 = vmatpush1.msra.mxu0 0.0
        %339 = vmatprep.subr.mxu0 0.0
        %340 = vmatpush1.msra.mxu0 0.0
        %341 = vmatprep.subr.mxu0 0.0
        %342 = vmatpush1.msra.mxu0 0.0
        %343 = vmatprep.subr.mxu0 0.0
        %344 = vmatpush1.msra.mxu0 0.0
        %345 = vmatprep.subr.mxu0 0.0
        %346 = vmatpush1.msra.mxu0 0.0
        %347 = vmatprep.subr.mxu0 0.0
        %348 = vmatpush1.msra.mxu0 0.0
        %349 = vmatprep.subr.mxu0 0.0
        %350 = vmatpush1.msra.mxu0 0.0
        %351 = vmatprep.subr.mxu0 0.0
        %352 = vmatpush1.msra.mxu0 %v316
        %353 = vmatprep.subr.mxu0 0.0
        %354 = vmatpush2.msra.mxu0 0.0
        %355 = vmatprep.subr.mxu0 0.0
        %356 = vmatpush2.msra.mxu0 0.0
        %357 = vmatprep.subr.mxu0 0.0
        %358 = vmatpush2.msra.mxu0 0.0
        %359 = vmatprep.subr.mxu0 0.0
        %360 = vmatpush2.msra.mxu0 0.0
        %361 = vmatprep.subr.mxu0 0.0
        %362 = vmatpush2.msra.mxu0 0.0
        %363 = vmatprep.subr.mxu0 0.0
        %364 = vmatpush2.msra.mxu0 0.0
        %365 = vmatprep.subr.mxu0 0.0
        %366 = vmatpush2.msra.mxu0 0.0
        %367 = vmatprep.subr.mxu0 0.0
        %368 = vmatpush2.msra.mxu0 0.0
        %369 = vmatprep.subr.mxu0 0.0
        %370 = vmatpush2.msra.mxu0 0.0
        %371 = vmatprep.subr.mxu0 0.0
        %372 = vmatpush2.msra.mxu0 0.0
        %373 = vmatprep.subr.mxu0 0.0
        %374 = vmatpush2.msra.mxu0 0.0
        %375 = vmatprep.subr.mxu0 0.0
        %376 = vmatpush2.msra.mxu0 0.0
        %377 = vmatprep.subr.mxu0 0.0
        %378 = vmatpush2.msra.mxu0 0.0
        %379 = vmatprep.subr.mxu0 0.0
        %380 = vmatpush2.msra.mxu0 0.0
        %381 = vmatprep.subr.mxu0 0.0
        %382 = vmatpush2.msra.mxu0 0.0
        %383 = vmatprep.subr.mxu0 0.0
        %384 = vmatpush2.msra.mxu0 0.0
        %385 = vmatprep.mubr.f32.mxu0 0.0
        %386 = vmatmul.mubr.f32.gmra.mxu0 %v319
        %v387 = vpop.f32.mrf.mxu0
        %v388 = vadd.f32 0.0, %v387
        %v389 = vpop.f32.mrf.mxu0
        %390 = vdwg.mxu0
        %v392 = vsel %vm317, %v292, 0
        %394 = vmatprep.subr.mxu0 0.0
        %395 = vmatpush1.msra.mxu0 0.0
        %396 = vmatprep.subr.mxu0 0.0
        %397 = vmatpush1.msra.mxu0 0.0
        %398 = vmatprep.subr.mxu0 0.0
        %399 = vmatpush1.msra.mxu0 0.0
        %400 = vmatprep.subr.mxu0 0.0
        %401 = vmatpush1.msra.mxu0 0.0
        %402 = vmatprep.subr.mxu0 0.0
        %403 = vmatpush1.msra.mxu0 0.0
        %404 = vmatprep.subr.mxu0 0.0
        %405 = vmatpush1.msra.mxu0 0.0
        %406 = vmatprep.subr.mxu0 0.0
        %407 = vmatpush1.msra.mxu0 0.0
        %408 = vmatprep.subr.mxu0 0.0
        %409 = vmatpush1.msra.mxu0 0.0
        %410 = vmatprep.subr.mxu0 0.0
        %411 = vmatpush1.msra.mxu0 0.0
        %412 = vmatprep.subr.mxu0 0.0
        %413 = vmatpush1.msra.mxu0 0.0
        %414 = vmatprep.subr.mxu0 0.0
        %415 = vmatpush1.msra.mxu0 0.0
        %416 = vmatprep.subr.mxu0 0.0
        %417 = vmatpush1.msra.mxu0 0.0
        %418 = vmatprep.subr.mxu0 0.0
        %419 = vmatpush1.msra.mxu0 0.0
        %420 = vmatprep.subr.mxu0 0.0
        %421 = vmatpush1.msra.mxu0 0.0
        %422 = vmatprep.subr.mxu0 0.0
        %423 = vmatpush1.msra.mxu0 0.0
        %424 = vmatprep.subr.mxu0 0.0
        %425 = vmatpush1.msra.mxu0 %v388
        %426 = vmatprep.subr.mxu0 0.0
        %427 = vmatpush2.msra.mxu0 0.0
        %428 = vmatprep.subr.mxu0 0.0
        %429 = vmatpush2.msra.mxu0 0.0
        %430 = vmatprep.subr.mxu0 0.0
        %431 = vmatpush2.msra.mxu0 0.0
        %432 = vmatprep.subr.mxu0 0.0
        %433 = vmatpush2.msra.mxu0 0.0
        %434 = vmatprep.subr.mxu0 0.0
        %435 = vmatpush2.msra.mxu0 0.0
        %436 = vmatprep.subr.mxu0 0.0
        %437 = vmatpush2.msra.mxu0 0.0
        %438 = vmatprep.subr.mxu0 0.0
        %439 = vmatpush2.msra.mxu0 0.0
        %440 = vmatprep.subr.mxu0 0.0
        %441 = vmatpush2.msra.mxu0 0.0
        %442 = vmatprep.subr.mxu0 0.0
        %443 = vmatpush2.msra.mxu0 0.0
        %444 = vmatprep.subr.mxu0 0.0
        %445 = vmatpush2.msra.mxu0 0.0
        %446 = vmatprep.subr.mxu0 0.0
        %447 = vmatpush2.msra.mxu0 0.0
        %448 = vmatprep.subr.mxu0 0.0
        %449 = vmatpush2.msra.mxu0 0.0
        %450 = vmatprep.subr.mxu0 0.0
        %451 = vmatpush2.msra.mxu0 0.0
        %452 = vmatprep.subr.mxu0 0.0
        %453 = vmatpush2.msra.mxu0 0.0
        %454 = vmatprep.subr.mxu0 0.0
        %455 = vmatpush2.msra.mxu0 0.0
        %456 = vmatprep.subr.mxu0 0.0
        %457 = vmatpush2.msra.mxu0 0.0
        %458 = vmatprep.mubr.f32.mxu0 0.0
        %459 = vmatmul.mubr.f32.gmra.mxu0 %v392
        %v460 = vpop.f32.mrf.mxu0
        %v461 = vadd.f32 0.0, %v460
        %v462 = vpop.f32.mrf.mxu0
        %463 = vdwg.mxu0
        %v464 = vsub.f32 %v316, %v461
        %v465 = vmul.f32 %v300, %v464
        %v466 = vadd.f32 %v461, %v465
        %v467 = vadd.f32 %v466, %v316
        %vm468 = vcmask 261120
        %v469 = vsel %vm468, %v467, 0.0
        %470 = vadd.xlane.f32.xlu0 %v469
        %v471 = vpop.xlane.xlu0 %470
        %v472 = vrcp.pop 32.0
        %v473 = vmul.f32 %v471, %v472
        %v474 = vsub.f32 %v467, %v473
        %v475 = vmul.f32 %v474, %v474
        %v476 = vsel %vm468, %v475, 0.0
        %477 = vadd.xlane.f32.xlu0 %v476
        %v478 = vpop.xlane.xlu0 %477
        %v479 = vmul.f32 %v478, %v472
        %v480 = vadd.f32 %v479, 1e-12
        %v481 = vrsqrt.pop %v480
        %v482 = vmul.f32 %v474, %v481
        %v483 = vmul.f32 %v307, %v482
        %v484 = vadd.f32 %v483, %v314
        %485 = vst.msk [vmem:[%s291] sm:$0xff] %vm468, %v484
        %s486 = sand.u32 %s163, 1
        %s487 = scalar_lea.sflag [#allocation4], %s486
        %s488 = sand.u32 %s163, 1
        %s489 = smul.addr %s488, 8
        %s490 = scalar_lea.vmem [#allocation8], %s489
        // Predicated region
        $region57: #{tpu_custom_call.1} parent=43 // pred_check
          %p491 = pneg %p173
        $region58: #{tpu_custom_call.1} parent=43 // pred_check_branch
          %493 = sbr.rel (%p491) target = $region60
        $region59: #{tpu_custom_call.1} parent=43 // pred_region
          %s495 = ssub.s32 128, 128
          %496 = vsyncadd %s487, %s495
          %s497 = smul.addr %s24, 128
          %s498 = scalar_lea.hbm %s6, %s497
          %s500 = sshll.u32 %s490, 4
          %s501 = int_to_ptr.vmem [resolvable:$true] %s500
          %503 = dma.vmem_to_hbm [thread:$0]  %s501, 128, %s498, %s487
        $region60: #{tpu_custom_call.1} parent=43 // pred_fallthru
          _
      $region44: #{tpu_custom_call.1} parent=5 // pred_fallthru
        _
      %p504 = scmp.le.s32.totalorder 2, %s19
      // Predicated region
      $region61: #{tpu_custom_call.1} parent=5 // pred_check
        %p505 = pneg %p504
      $region62: #{tpu_custom_call.1} parent=5 // pred_check_branch
        %507 = sbr.rel (%p505) target = $region64
      $region63: #{tpu_custom_call.1} parent=5 // pred_region
        %s508 = ssub.s32 %s19, 2
        // Predicated region
        $region65: #{tpu_custom_call.1} parent=63 // pred_check
          %p509 = pneg %p179
        $region66: #{tpu_custom_call.1} parent=63 // pred_check_branch
          %511 = sbr.rel (%p509) target = $region68
        $region67: #{tpu_custom_call.1} parent=63 // pred_region
          %s512 = sand.u32 %s164, 1
          %s513 = scalar_lea.sflag [#allocation4], %s512
          %s514 = sand.u32 %s164, 1
          %s515 = smul.addr %s514, 8
          %s516 = scalar_lea.vmem [#allocation8], %s515
          %517 = dma.done %s513, 128
        $region68: #{tpu_custom_call.1} parent=63 // pred_fallthru
          _
      $region64: #{tpu_custom_call.1} parent=5 // pred_fallthru
        _
    $region6: #{tpu_custom_call.1} parent=1 // loop_footer
      %s23 = sadd.s32 1, %s19
    $region7: #{tpu_custom_call.1} parent=1 // loop_footer_branch
      %18 = sbr.rel target = $region3
    $region8: #{tpu_custom_call.1} parent=1 // loop_exit
      _
    %518 = vsyncpa [#allocation3], 1
    %s519 = scalar_lea.sflag [#allocation3], 1
    %520 = vsyncpa %s519, 1
    %521 = vsyncpa [#allocation6], 1
    %522 = vsyncpa [#allocation4], 1
    %s523 = scalar_lea.sflag [#allocation4], 1
    %524 = vsyncpa %s523, 1

</llo_original>
